<compile_context>
chip_gen: v7x
topology: tpu7x:2x2x1
jax: 0.10.0
libtpu: 0.0.40
codegen_flags: <defaults>
</compile_context>

<pallas_src>
import functools

import jax
import jax.numpy as jnp
from jax.experimental import pallas as pl
from jax.experimental.pallas import tpu as pltpu


def _ls_ce_kernel(pred_ref, tgt_ref, out_ref, *, smoothing, n_classes):
    """Writes per-row label-smoothed NLL for one (TILE_N, C) logits tile."""
    x = pred_ref[...].astype(jnp.float32)                 # (TILE_N, C)
    tile_n, c = x.shape                                   # c == n_classes (C untiled)

    # Numerically-stable log-softmax row statistics, all (TILE_N, 1).
    m = jnp.max(x, axis=-1, keepdims=True)
    shifted = x - m
    lse = jnp.log(jnp.sum(jnp.exp(shifted), axis=-1, keepdims=True))

    # loss_row = -sum_c true_dist[c] * logp[c]
    #          = -sum_c w[c] * (shifted[c] - lse)
    #          = lse - sum_c w[c] * shifted[c]        (since sum_c w[c] == 1)
    on = jnp.float32(1.0 - smoothing)
    off = jnp.float32(smoothing / (n_classes - 1))        # global C, not block-local
    col = jax.lax.broadcasted_iota(jnp.int32, (tile_n, c), 1)
    w = jnp.where(col == tgt_ref[...], on, off)           # (TILE_N, C)

    out_ref[...] = lse - jnp.sum(w * shifted, axis=-1, keepdims=True)


def _vmem_capacity_bytes():
    try:
        return int(pltpu.get_tpu_info().vmem_capacity_bytes)
    except Exception:
        return 128 * 1024 * 1024                          # v5e/v6e default


def _gen_aware_budgets():
    vmem_cap = _vmem_capacity_bytes()
    if vmem_cap <= 64 * 1024 * 1024:
        # v7x-class: 64 MiB physical VMEM per TC. bf16 tile T costs ~8T once
        # double-buffering and the f32 temporaries are counted, so keep the
        # logits tile ~3 MiB and the scoped limit <= 40 MiB.
        return 3 * 1024 * 1024, 40 * 1024 * 1024
    # v5e/v6e: 128 MiB physical VMEM -> bigger tiles amortize the ~0.35 us
    # per-grid-step overhead and push HBM-roofline utilization toward 90%+.
    return 6 * 1024 * 1024, 96 * 1024 * 1024


def _auto_tile_n(n, c, itemsize, budget_bytes):
    rows = max(8, min(n, budget_bytes // max(1, c * itemsize)))
    return ((rows + 7) // 8) * 8                          # sublane multiple of 8


def label_smoothing_cross_entropy(pred, target, smoothing=0.1, tile_n=None):
    """pred: (N, C) float (f32/bf16); target: (N,) int. Returns scalar f32 loss."""
    n, c = pred.shape
    budget_bytes, vmem_limit = _gen_aware_budgets()
    if tile_n is None:
        tile_n = _auto_tile_n(n, c, jnp.dtype(pred.dtype).itemsize, budget_bytes)
    tile_n = max(8, ((int(tile_n) + 7) // 8) * 8)
    num_tiles = pl.cdiv(n, tile_n)

    tgt2d = target.astype(jnp.int32).reshape(n, 1)
    kernel = functools.partial(_ls_ce_kernel, smoothing=float(smoothing),
                               n_classes=c)

    per_row = pl.pallas_call(
        kernel,
        out_shape=jax.ShapeDtypeStruct((n, 1), jnp.float32),
        grid=(num_tiles,),
        in_specs=[
            pl.BlockSpec((tile_n, c), lambda i: (i, 0)),   # logits tile
            pl.BlockSpec((tile_n, 1), lambda i: (i, 0)),   # targets tile
        ],
        out_specs=pl.BlockSpec((tile_n, 1), lambda i: (i, 0)),  # per-row loss
        compiler_params=pltpu.CompilerParams(
            # Every grid step is independent -> shard the batch axis across
            # TensorCores (v7x megacore); no-op on single-TC v5e/v6e.
            dimension_semantics=("parallel",),
            vmem_limit_bytes=vmem_limit,
        ),
    )(pred, tgt2d)

    return jnp.sum(per_row) / jnp.float32(n)


if __name__ == "__main__":
    key = jax.random.PRNGKey(0)
    k1, k2 = jax.random.split(key)

    # CIFAR10-like small shapes: 20 examples over 10 classes.  N is chosen so
    # the explicit tile_n=8 run exercises a multi-step grid with a partial
    # (OOB-masked) last tile.
    N, C = 20, 10
    smoothing = 0.1
    pred = jax.random.normal(k1, (N, C), dtype=jnp.float32)
    target = jax.random.randint(k2, (N,), 0, C, dtype=jnp.int32)

    # Pure-JAX reference (same math as the PyTorch module).
    log_probs = jax.nn.log_softmax(pred, axis=-1)
    true_dist = jnp.full((N, C), smoothing / (C - 1), dtype=jnp.float32)
    true_dist = true_dist.at[jnp.arange(N), target].set(1.0 - smoothing)
    ref = jnp.mean(jnp.sum(-true_dist * log_probs, axis=-1))

    # Multi-tile path: 3 grid steps, last tile only partially valid.
    loss_tiled = label_smoothing_cross_entropy(pred, target, smoothing, tile_n=8)
    jax.block_until_ready(loss_tiled)
    assert jnp.allclose(loss_tiled, ref, atol=1e-5, rtol=1e-5), (loss_tiled, ref)

    # Auto-tile path (single tile here; generation-aware budget on real sizes).
    loss_auto = label_smoothing_cross_entropy(pred, target, smoothing)
    jax.block_until_ready(loss_auto)
    assert jnp.allclose(loss_auto, ref, atol=1e-5, rtol=1e-5), (loss_auto, ref)

    print("KERNEL_OK")
</pallas_src>

<mosaic_0001>
module attributes {stable_mosaic.version = 11 : i64} {
  func.func @_ls_ce_kernel(%arg0: i32, %arg1: memref<8x10xf32, #tpu.memory_space<vmem>>, %arg2: memref<8x1xi32, #tpu.memory_space<vmem>>, %arg3: memref<8x1xf32, #tpu.memory_space<vmem>>) attributes {dimension_semantics = [#tpu.dimension_semantics<parallel>], iteration_bounds = array<i64: 3>, scalar_prefetch = 0 : i64, scratch_operands = 0 : i64, tpu.core_type = #tpu.core_type<tc>, window_params = [{transform_indices = @transform_0, window_bounds = array<i64: 8, 10>}, {transform_indices = @transform_1, window_bounds = array<i64: 8, 1>}, {transform_indices = @transform_2, window_bounds = array<i64: 8, 1>}]} {
    %c0 = arith.constant 0 : index
    %c0_0 = arith.constant 0 : index
    %0 = vector.load %arg1[%c0, %c0_0] : memref<8x10xf32, #tpu.memory_space<vmem>>, vector<8x10xf32>
    %cst = arith.constant dense<0xFF800000> : vector<8xf32>
    %1 = vector.multi_reduction <maximumf>, %0, %cst [1] : vector<8x10xf32> to vector<8xf32>
    %2 = vector.shape_cast %1 : vector<8xf32> to vector<8x1xf32>
    %3 = vector.broadcast %2 : vector<8x1xf32> to vector<8x10xf32>
    %4 = arith.subf %0, %3 : vector<8x10xf32>
    %5 = math.exp %4 : vector<8x10xf32>
    %cst_1 = arith.constant dense<0.000000e+00> : vector<8xf32>
    %6 = vector.multi_reduction <add>, %5, %cst_1 [1] : vector<8x10xf32> to vector<8xf32>
    %7 = vector.shape_cast %6 : vector<8xf32> to vector<8x1xf32>
    %8 = math.log %7 : vector<8x1xf32>
    %9 = tpu.iota {dimensions = array<i32: 1>} : vector<8x10xi32>
    %c0_2 = arith.constant 0 : index
    %c0_3 = arith.constant 0 : index
    %10 = vector.load %arg2[%c0_2, %c0_3] : memref<8x1xi32, #tpu.memory_space<vmem>>, vector<8x1xi32>
    %11 = vector.broadcast %10 : vector<8x1xi32> to vector<8x10xi32>
    %12 = arith.cmpi eq, %9, %11 : vector<8x10xi32>
    %cst_4 = arith.constant 0.899999976 : f32
    %cst_5 = arith.constant 0.0111111114 : f32
    %13 = vector.broadcast %cst_4 : f32 to vector<8x10xf32>
    %14 = vector.broadcast %cst_5 : f32 to vector<8x10xf32>
    %15 = arith.select %12, %13, %14 : vector<8x10xi1>, vector<8x10xf32>
    %16 = arith.mulf %15, %4 : vector<8x10xf32>
    %cst_6 = arith.constant dense<0.000000e+00> : vector<8xf32>
    %17 = vector.multi_reduction <add>, %16, %cst_6 [1] : vector<8x10xf32> to vector<8xf32>
    %18 = vector.shape_cast %17 : vector<8xf32> to vector<8x1xf32>
    %19 = arith.subf %8, %18 : vector<8x1xf32>
    %c0_7 = arith.constant 0 : index
    %c0_8 = arith.constant 0 : index
    %20 = vector.load %arg3[%c0_7, %c0_8] : memref<8x1xf32, #tpu.memory_space<vmem>>, vector<8x1xf32>
    tpu.vector_store %arg3[%c0_7, %c0_8], %19 {strides = array<i32>} : memref<8x1xf32, #tpu.memory_space<vmem>>, vector<8x1xf32>,
    return
  }
  func.func @transform_0(%arg0: i32) -> (i32, i32) {
    %c0_i32 = arith.constant 0 : i32
    %c0_i32_0 = arith.constant 0 : i32
    return %arg0, %c0_i32 : i32, i32
  }
  func.func @transform_1(%arg0: i32) -> (i32, i32) {
    %c0_i32 = arith.constant 0 : i32
    %c0_i32_0 = arith.constant 0 : i32
    return %arg0, %c0_i32 : i32, i32
  }
  func.func @transform_2(%arg0: i32) -> (i32, i32) {
    %c0_i32 = arith.constant 0 : i32
    %c0_i32_0 = arith.constant 0 : i32
    return %arg0, %c0_i32 : i32, i32
  }
}

</mosaic_0001>

<llo_original>
// kernel: tpu_custom_call.1
$region0: #{tpu_custom_call.1}
  #allocation0 [shape = 'u32[]', space=smem, size = 0x4, offset = 0x4, fixed_abs, tag = 'smem constant byte address 0x4 - core index']
  #allocation1 [shape = 'u32[144,128]{1,0:T(1,128)}', space=vmem, size = 0x12000, scoped, tag = 'internal scratch']
  %s0 = inlined_call_operand.hbm [shape: f32[20,10], index: 0, kind: input, shape index: {}]
  %s1 = inlined_call_operand.hbm [shape: s32[20,1], index: 1, kind: input, shape index: {}]
  %s2 = inlined_call_operand.hbm [shape: f32[20,1], index: 2, kind: output, shape index: {}]
  %s3 = sld [smem:[#allocation0]]
  $region49: #{tpu_custom_call.1} parent=0
    _
  %s5 = ssub.s32 1, %s3
  %s6 = scalar_select 0, %s5, %s3
  $region1: #{tpu_custom_call.1} parent=0
    #allocation2 [shape = 'u8[8192]{0}', space=vmem, size = 0x2000, scoped, tag = 'input window, operand 0']
    #allocation3 [shape = 's32[2]{0}', space=sflag, size = 0x8, scoped, tag = 'scoped memory for tpu_custom_call.1']
    #allocation4 [shape = 's32[2]{0}', space=sflag, size = 0x8, scoped, tag = 'scoped memory for tpu_custom_call.1']
    #allocation5 [shape = 'u8[8192]{0}', space=vmem, size = 0x2000, scoped, tag = 'input window, operand 1']
    #allocation6 [shape = 's32[2]{0}', space=sflag, size = 0x8, scoped, tag = 'scoped memory for tpu_custom_call.1']
    #allocation7 [shape = 'u8[8192]{0}', space=vmem, size = 0x2000, scoped, tag = 'output window, operand 0']
    %7 = vsyncpa [#allocation3], 0
    %s8 = scalar_lea.sflag [#allocation3], 1
    %9 = vsyncpa %s8, 0
    %10 = vsyncpa [#allocation6], 0
    %s11 = scalar_lea.sflag [#allocation6], 1
    %12 = vsyncpa %s11, 0
    %13 = vsyncpa [#allocation4], 0
    %s14 = scalar_lea.sflag [#allocation4], 1
    %15 = vsyncpa %s14, 0
    loop: start=0, step=1, limit=5
    $region2: #{tpu_custom_call.1} parent=1 // loop_pre_header
      _
    $region3: #{tpu_custom_call.1} parent=1 // loop_header
      %s17 = sphi 0, %s21
      %p18 = scmp.ge.s32.totalorder %s17, 5
      %s27 = sphi 0, %s29
      %s30 = sphi 0, %s27
      %s31 = sphi 0, %s30
      %s47 = sphi 0, %s31
      %s53 = sphi 0, %s55
      %s56 = sphi 0, %s53
      %s57 = sphi 0, %s56
      %s73 = sphi 0, %s57
      %s79 = sphi 0, %s81
      %s82 = sphi 0, %s79
      %s83 = sphi 0, %s82
      %s99 = sphi 0, %s83
    $region4: #{tpu_custom_call.1} parent=1 // loop_header_branch
      %20 = sbr.rel (%p18) target = $region8
    $region5: #{tpu_custom_call.1} parent=1 // loop_body
      %s22 = ssub.s32 %s17, 1
      %s23 = ssub.s32 %s17, 2
      %s24 = sadd.s32 %s17, 1
      %s25 = ssub.s32 %s17, %s24
      %p26 = scmp.eq.s32.totalorder %s25, 0
      %s28 = sadd.s32 %s27, 1
      %s29 = scalar_select %p26, %s27, %s28
      %p32 = pneg %p26
      %p33 = scmp.eq.s32.totalorder %s17, 2
      %p34 = por %p32, %p33
      %p35 = scmp.ne.s32.totalorder %s27, %s30
      %p36 = scmp.eq.s32.totalorder %s17, 0
      %p37 = por %p35, %p36
      %p38 = scmp.ne.s32.totalorder %s27, %s30
      %p39 = scmp.eq.s32.totalorder %s22, 2
      %p40 = por %p38, %p39
      %p41 = scmp.ne.s32.totalorder %s30, %s31
      %p42 = scmp.eq.s32.totalorder %s22, 0
      %p43 = por %p41, %p42
      %p44 = scmp.ne.s32.totalorder %s30, %s31
      %p45 = scmp.eq.s32.totalorder %s23, 2
      %p46 = por %p44, %p45
      %p48 = scmp.ne.s32.totalorder %s31, %s47
      %p49 = scmp.eq.s32.totalorder %s23, 0
      %p50 = por %p48, %p49
      %s51 = ssub.s32 %s17, %s24
      %p52 = scmp.eq.s32.totalorder %s51, 0
      %s54 = sadd.s32 %s53, 1
      %s55 = scalar_select %p52, %s53, %s54
      %p58 = pneg %p52
      %p59 = scmp.eq.s32.totalorder %s17, 2
      %p60 = por %p58, %p59
      %p61 = scmp.ne.s32.totalorder %s53, %s56
      %p62 = scmp.eq.s32.totalorder %s17, 0
      %p63 = por %p61, %p62
      %p64 = scmp.ne.s32.totalorder %s53, %s56
      %p65 = scmp.eq.s32.totalorder %s22, 2
      %p66 = por %p64, %p65
      %p67 = scmp.ne.s32.totalorder %s56, %s57
      %p68 = scmp.eq.s32.totalorder %s22, 0
      %p69 = por %p67, %p68
      %p70 = scmp.ne.s32.totalorder %s56, %s57
      %p71 = scmp.eq.s32.totalorder %s23, 2
      %p72 = por %p70, %p71
      %p74 = scmp.ne.s32.totalorder %s57, %s73
      %p75 = scmp.eq.s32.totalorder %s23, 0
      %p76 = por %p74, %p75
      %s77 = ssub.s32 %s17, %s24
      %p78 = scmp.eq.s32.totalorder %s77, 0
      %s80 = sadd.s32 %s79, 1
      %s81 = scalar_select %p78, %s79, %s80
      %p84 = pneg %p78
      %p85 = scmp.eq.s32.totalorder %s17, 2
      %p86 = por %p84, %p85
      %p87 = scmp.ne.s32.totalorder %s79, %s82
      %p88 = scmp.eq.s32.totalorder %s17, 0
      %p89 = por %p87, %p88
      %p90 = scmp.ne.s32.totalorder %s79, %s82
      %p91 = scmp.eq.s32.totalorder %s22, 2
      %p92 = por %p90, %p91
      %p93 = scmp.ne.s32.totalorder %s82, %s83
      %p94 = scmp.eq.s32.totalorder %s22, 0
      %p95 = por %p93, %p94
      %p96 = scmp.ne.s32.totalorder %s82, %s83
      %p97 = scmp.eq.s32.totalorder %s23, 2
      %p98 = por %p96, %p97
      %p100 = scmp.ne.s32.totalorder %s83, %s99
      %p101 = scmp.eq.s32.totalorder %s23, 0
      %p102 = por %p100, %p101
      %p103 = scmp.le.s32.totalorder 1, %s17
      %p104 = scmp.lt.s32.totalorder %s17, 4
      %p105 = pnand %p103, %p104
      %p106 = pneg %p105
      // Predicated region
      $region9: #{tpu_custom_call.1} parent=5 // pred_check
        _
      $region10: #{tpu_custom_call.1} parent=5 // pred_check_branch
        %108 = sbr.rel (%p105) target = $region12
      $region11: #{tpu_custom_call.1} parent=5 // pred_region
        %s109 = ssub.s32 %s17, 1
      $region12: #{tpu_custom_call.1} parent=5 // pred_fallthru
        _
      %p110 = scmp.lt.s32.totalorder %s17, 3
      // Predicated region
      $region13: #{tpu_custom_call.1} parent=5 // pred_check
        %p111 = pneg %p110
      $region14: #{tpu_custom_call.1} parent=5 // pred_check_branch
        %113 = sbr.rel (%p111) target = $region16
      $region15: #{tpu_custom_call.1} parent=5 // pred_region
        // Predicated region
        $region17: #{tpu_custom_call.1} parent=15 // pred_check
          %p114 = pneg %p37
        $region18: #{tpu_custom_call.1} parent=15 // pred_check_branch
          %116 = sbr.rel (%p114) target = $region20
        $region19: #{tpu_custom_call.1} parent=15 // pred_region
          %s117 = sand.u32 %s27, 1
          %s118 = scalar_lea.sflag [#allocation3], %s117
          %s119 = sand.u32 %s27, 1
          %s120 = smul.addr %s119, 8
          %s121 = scalar_lea.vmem [#allocation2], %s120
          %s123 = ssub.s32 128, 128
          %124 = vsyncadd %s118, %s123
          %s125 = smul.addr %s17, 128
          %s126 = scalar_lea.hbm %s0, %s125
          %s128 = sshll.u32 %s121, 4
          %s129 = int_to_ptr.vmem [resolvable:$true] %s128
          %131 = dma.hbm_to_vmem [thread:$0]  %s126, 128, %s129, %s118
        $region20: #{tpu_custom_call.1} parent=15 // pred_fallthru
          _
        // Predicated region
        $region21: #{tpu_custom_call.1} parent=15 // pred_check
          %p132 = pneg %p63
        $region22: #{tpu_custom_call.1} parent=15 // pred_check_branch
          %134 = sbr.rel (%p132) target = $region24
        $region23: #{tpu_custom_call.1} parent=15 // pred_region
          %s135 = sand.u32 %s53, 1
          %s136 = scalar_lea.sflag [#allocation6], %s135
          %s137 = sand.u32 %s53, 1
          %s138 = smul.addr %s137, 8
          %s139 = scalar_lea.vmem [#allocation5], %s138
          %s141 = ssub.s32 128, 128
          %142 = vsyncadd %s136, %s141
          %s143 = smul.addr %s17, 128
          %s144 = scalar_lea.hbm %s1, %s143
          %s146 = sshll.u32 %s139, 4
          %s147 = int_to_ptr.vmem [resolvable:$true] %s146
          %149 = dma.hbm_to_vmem [thread:$0]  %s144, 128, %s147, %s136
        $region24: #{tpu_custom_call.1} parent=15 // pred_fallthru
          _
      $region16: #{tpu_custom_call.1} parent=5 // pred_fallthru
        _
      %p150 = scmp.le.s32.totalorder 1, %s17
      %p151 = scmp.lt.s32.totalorder %s17, 4
      %p152 = pnand %p150, %p151
      %p153 = pneg %p152
      // Predicated region
      $region25: #{tpu_custom_call.1} parent=5 // pred_check
        _
      $region26: #{tpu_custom_call.1} parent=5 // pred_check_branch
        %155 = sbr.rel (%p152) target = $region28
      $region27: #{tpu_custom_call.1} parent=5 // pred_region
        %s156 = ssub.s32 %s17, 1
        %s157 = sand.u32 %s30, 1
        %s158 = scalar_lea.sflag [#allocation3], %s157
        %s159 = sand.u32 %s30, 1
        %s160 = smul.addr %s159, 8
        %s161 = scalar_lea.vmem [#allocation2], %s160
        // Predicated region
        $region29: #{tpu_custom_call.1} parent=27 // pred_check
          %p162 = pneg %p43
        $region30: #{tpu_custom_call.1} parent=27 // pred_check_branch
          %164 = sbr.rel (%p162) target = $region32
        $region31: #{tpu_custom_call.1} parent=27 // pred_region
          %165 = dma.done %s158, 128
        $region32: #{tpu_custom_call.1} parent=27 // pred_fallthru
          _
        %s166 = sand.u32 %s56, 1
        %s167 = scalar_lea.sflag [#allocation6], %s166
        %s168 = sand.u32 %s56, 1
        %s169 = smul.addr %s168, 8
        %s170 = scalar_lea.vmem [#allocation5], %s169
        // Predicated region
        $region33: #{tpu_custom_call.1} parent=27 // pred_check
          %p171 = pneg %p69
        $region34: #{tpu_custom_call.1} parent=27 // pred_check_branch
          %173 = sbr.rel (%p171) target = $region36
        $region35: #{tpu_custom_call.1} parent=27 // pred_region
          %174 = dma.done %s167, 128
        $region36: #{tpu_custom_call.1} parent=27 // pred_fallthru
          _
        %s175 = sand.u32 %s30, 1
        %s176 = scalar_lea.sflag [#allocation3], %s175
        %s177 = sand.u32 %s30, 1
        %s178 = smul.addr %s177, 8
        %s179 = scalar_lea.vmem [#allocation2], %s178
        %p180 = pneg %p43
        %p181 = pneg %p40
        %s182 = sand.u32 %s56, 1
        %s183 = scalar_lea.sflag [#allocation6], %s182
        %s184 = sand.u32 %s56, 1
        %s185 = smul.addr %s184, 8
        %s186 = scalar_lea.vmem [#allocation5], %s185
        %p187 = pneg %p69
        %p188 = pneg %p66
        %p189 = pneg %p95
        %p190 = pneg %p92
        %s191 = sand.u32 %s82, 1
        %s192 = scalar_lea.sflag [#allocation4], %s191
        %s193 = sand.u32 %s82, 1
        %s194 = smul.addr %s193, 8
        %s195 = scalar_lea.vmem [#allocation7], %s194
        %v196 = vld [vmem:[%s161] sm:$0xff]
        %vm197 = vcmask 80896
        %v198 = vsel %vm197, %v196, -inf
        %199 = vmax.xlane.f32.xlu0 %v198
        %v200 = vpop.xlane.xlu0 %199
        %v201 = vsub.f32 %v196, %v200
        %v202 = vmul.f32 %v201, 1.442695
        %v203 = vpow.pop %v202
        %v204 = vsel %vm197, %v203, 0.0
        %205 = vadd.xlane.f32.xlu0 %v204
        %v206 = vpop.xlane.xlu0 %205
        %v207 = vlog2.pop %v206
        %v208 = vmul.f32 %v207, 0.6931472
        %v209 = vlaneseq
        %v210 = vand.u32 %v209, 127
        %v211 = vld [vmem:[%s170] sm:$0xff]
        %212 = vset.pattern.permute.xlu0 0
        %213 = vperm.xlu0 %212, %v211
        %v214 = vpop.permute.xlu0 %213
        %vm215 = vcmp.eq.s32.totalorder %v210, %v214
        %v216 = vsel %vm215, 0.9, 0.011111111
        %v217 = vmul.f32 %v216, %v201
        %v218 = vsel %vm197, %v217, 0.0
        %219 = vadd.xlane.f32.xlu0 %v218
        %v220 = vpop.xlane.xlu0 %219
        %v221 = vsub.f32 %v208, %v220
        %vm222 = vcmask 7168
        %223 = vst.msk [vmem:[%s195] sm:$0xff] %vm222, %v221
        %s224 = sand.u32 %s82, 1
        %s225 = scalar_lea.sflag [#allocation4], %s224
        %s226 = sand.u32 %s82, 1
        %s227 = smul.addr %s226, 8
        %s228 = scalar_lea.vmem [#allocation7], %s227
        // Predicated region
        $region37: #{tpu_custom_call.1} parent=27 // pred_check
          %p229 = pneg %p92
        $region38: #{tpu_custom_call.1} parent=27 // pred_check_branch
          %231 = sbr.rel (%p229) target = $region40
        $region39: #{tpu_custom_call.1} parent=27 // pred_region
          %s233 = ssub.s32 128, 128
          %234 = vsyncadd %s225, %s233
          %s235 = smul.addr %s22, 128
          %s236 = scalar_lea.hbm %s2, %s235
          %s238 = sshll.u32 %s228, 4
          %s239 = int_to_ptr.vmem [resolvable:$true] %s238
          %241 = dma.vmem_to_hbm [thread:$0]  %s239, 128, %s236, %s225
        $region40: #{tpu_custom_call.1} parent=27 // pred_fallthru
          _
      $region28: #{tpu_custom_call.1} parent=5 // pred_fallthru
        _
      %p242 = scmp.le.s32.totalorder 2, %s17
      // Predicated region
      $region41: #{tpu_custom_call.1} parent=5 // pred_check
        %p243 = pneg %p242
      $region42: #{tpu_custom_call.1} parent=5 // pred_check_branch
        %245 = sbr.rel (%p243) target = $region44
      $region43: #{tpu_custom_call.1} parent=5 // pred_region
        %s246 = ssub.s32 %s17, 2
        // Predicated region
        $region45: #{tpu_custom_call.1} parent=43 // pred_check
          %p247 = pneg %p98
        $region46: #{tpu_custom_call.1} parent=43 // pred_check_branch
          %249 = sbr.rel (%p247) target = $region48
        $region47: #{tpu_custom_call.1} parent=43 // pred_region
          %s250 = sand.u32 %s83, 1
          %s251 = scalar_lea.sflag [#allocation4], %s250
          %s252 = sand.u32 %s83, 1
          %s253 = smul.addr %s252, 8
          %s254 = scalar_lea.vmem [#allocation7], %s253
          %255 = dma.done %s251, 128
        $region48: #{tpu_custom_call.1} parent=43 // pred_fallthru
          _
      $region44: #{tpu_custom_call.1} parent=5 // pred_fallthru
        _
    $region6: #{tpu_custom_call.1} parent=1 // loop_footer
      %s21 = sadd.s32 1, %s17
    $region7: #{tpu_custom_call.1} parent=1 // loop_footer_branch
      %16 = sbr.rel target = $region3
    $region8: #{tpu_custom_call.1} parent=1 // loop_exit
      _
    %256 = vsyncpa [#allocation3], 1
    %s257 = scalar_lea.sflag [#allocation3], 1
    %258 = vsyncpa %s257, 1
    %259 = vsyncpa [#allocation6], 1
    %s260 = scalar_lea.sflag [#allocation6], 1
    %261 = vsyncpa %s260, 1
    %262 = vsyncpa [#allocation4], 1
    %s263 = scalar_lea.sflag [#allocation4], 1
    %264 = vsyncpa %s263, 1

</llo_original>
